<compile_context>
chip_gen: v7x
topology: tpu7x:2x2x1
jax: 0.10.0
libtpu: 0.0.40
codegen_flags: <defaults>
</compile_context>

<pallas_src>
import functools

import jax
import jax.numpy as jnp
from jax.experimental import pallas as pl
from jax.experimental.pallas import tpu as pltpu

# Hyper-parameters the original script takes from argparse (hard-coded here).
MODEL = "VGNAE"            # args.model
SCALING_FACTOR = 1.8       # args.scaling_factor
ALPHA = 0.5                # APPNP(alpha=0.5)
K = 2                      # APPNP(K=2)
EPS = 1e-12                # F.normalize eps

F_PAD = 64                 # per-path padded feature width
CF = 2 * F_PAD             # fused (mu | aux) width -> 128 lanes, lane-dense
MAX_TM = 512               # A_hat row tile (streaming path)
MAX_TK = 2048              # A_hat contraction tile (streaming path)
PROP_MATMUL_DTYPE = jnp.bfloat16   # MXU operand dtype for the A_hat matmuls


def _round_up(x, m):
    return ((x + m - 1) // m) * m


def _pick_tile(n_pad, max_tile, min_tiles=1):
    """Largest multiple of 128 dividing n_pad, <= max_tile, leaving >= min_tiles tiles."""
    best = 128
    c = 128
    lim = min(max_tile, n_pad)
    while c <= lim:
        if n_pad % c == 0 and (n_pad // c) >= min_tiles:
            best = c
        c += 128
    return best


@functools.lru_cache(maxsize=None)
def _vmem_budget_bytes():
    """~3/4 of physical per-core VMEM (v5e/v6e 128 MiB, v7x 64 MiB); used both as the
    scoped vmem_limit and the A_hat-residency threshold."""
    cap = 64 * 1024 * 1024     # conservative default (v7x physical)
    try:
        info = pltpu.get_tpu_info()
        cap = int(getattr(info, "vmem_capacity_bytes", cap) or cap)
    except Exception:
        pass
    return (cap * 3) // 4


# --------------------------------------------------------------------------- #
# Stage 1: fused linear1/linear2 (bf16 MXU) + L2 normalize * scaling (mu half)
# --------------------------------------------------------------------------- #
def encode_kernel(x_ref, w_ref, b_ref, h0_ref):
    # MXU operands are bf16; accumulate and post-process in f32.
    h = jnp.dot(x_ref[...], w_ref[...],
                preferred_element_type=jnp.float32) + b_ref[...]
    # columns [0, F_PAD): linear2 path (normalize * scale); [F_PAD, CF): linear1 path
    col = jax.lax.broadcasted_iota(jnp.int32, h.shape, 1)
    is_mu = col < F_PAD
    sumsq = jnp.sum(jnp.where(is_mu, h * h, 0.0), axis=1, keepdims=True)
    scale = SCALING_FACTOR * jax.lax.rsqrt(jnp.maximum(sumsq, EPS * EPS))
    h0_ref[...] = jnp.where(is_mu, h * scale, h)


# --------------------------------------------------------------------------- #
# Stage 2a (A_hat fits VMEM): both APPNP sweeps fused, A_hat read from HBM once.
# --------------------------------------------------------------------------- #
def appnp_resident_kernel(a_ref, h0_ref, out_ref):
    a = a_ref[...]            # (n_pad, n_pad) bf16, VMEM-resident
    h0 = h0_ref[...]          # (n_pad, CF)    f32
    h = h0
    for _ in range(K):
        h = (1.0 - ALPHA) * jnp.dot(a, h.astype(PROP_MATMUL_DTYPE),
                                    preferred_element_type=jnp.float32) + ALPHA * h0
    out_ref[...] = h


def _propagate_resident(ap, h0, vmem_limit):
    n_pad, cf = h0.shape
    return pl.pallas_call(
        appnp_resident_kernel,
        out_shape=jax.ShapeDtypeStruct((n_pad, cf), jnp.float32),
        grid_spec=pltpu.PrefetchScalarGridSpec(
            num_scalar_prefetch=0,
            grid=(1,),
            in_specs=[pl.BlockSpec((n_pad, n_pad), lambda i: (0, 0)),
                      pl.BlockSpec((n_pad, cf), lambda i: (0, 0))],
            out_specs=pl.BlockSpec((n_pad, cf), lambda i: (0, 0)),
        ),
        compiler_params=pltpu.CompilerParams(
            dimension_semantics=("arbitrary",),
            vmem_limit_bytes=vmem_limit),
    )(ap, h0)


# --------------------------------------------------------------------------- #
# Stage 2b (streaming): one APPNP step, A_hat streamed in (tm, tk) bf16 tiles,
# h (bf16) VMEM-resident, accumulation directly into the resident f32 out block.
# --------------------------------------------------------------------------- #
def appnp_step_kernel(a_ref, hb_ref, h0_ref, out_ref):
    k = pl.program_id(1)
    tk = a_ref.shape[1]

    @pl.when(k == 0)
    def _init():
        out_ref[...] = ALPHA * h0_ref[...]

    off = pl.multiple_of(k * tk, tk)
    out_ref[...] += (1.0 - ALPHA) * jnp.dot(
        a_ref[...], hb_ref[pl.ds(off, tk), :],
        preferred_element_type=jnp.float32)


def _propagate_streamed(ap, h0, tm, tk, vmem_limit):
    n_pad, cf = h0.shape
    step = pl.pallas_call(
        appnp_step_kernel,
        out_shape=jax.ShapeDtypeStruct((n_pad, cf), jnp.float32),
        grid_spec=pltpu.PrefetchScalarGridSpec(
            num_scalar_prefetch=0,
            grid=(n_pad // tm, n_pad // tk),
            in_specs=[pl.BlockSpec((tm, tk), lambda i, k: (i, k)),      # A_hat (bf16)
                      pl.BlockSpec((n_pad, cf), lambda i, k: (0, 0)),   # h (bf16, resident)
                      pl.BlockSpec((tm, cf), lambda i, k: (i, 0))],     # h0 (f32)
            out_specs=pl.BlockSpec((tm, cf), lambda i, k: (i, 0)),
        ),
        compiler_params=pltpu.CompilerParams(
            dimension_semantics=("parallel", "arbitrary"),
            vmem_limit_bytes=vmem_limit),
    )
    h = h0
    for _ in range(K):
        hb = h.astype(PROP_MATMUL_DTYPE)   # cast once per step (tiny vs. A stream)
        h = step(ap, hb, h0)
    return h


# --------------------------------------------------------------------------- #
# Wrapper
# --------------------------------------------------------------------------- #
@jax.jit
def encoder_forward(x, w1, b1, w2, b2, a_hat):
    n, f_in = x.shape
    f_out = w1.shape[1]
    assert f_out <= F_PAD

    # Pad nodes only to the lane boundary (128), NOT the tile size: A_hat traffic
    # scales with n_pad^2, so over-padding is a direct wall-time multiplier.
    n_pad = _round_up(n, 128)
    vmem_limit = _vmem_budget_bytes()

    # ---- Stage 1 inputs: bf16 MXU operands, f32 bias ----
    xp = jnp.zeros((n_pad, f_in), jnp.bfloat16).at[:n].set(x.astype(jnp.bfloat16))
    # Fused weight/bias: columns [0,F_PAD) = linear2 (mu path), [F_PAD,CF) = linear1.
    wf = jnp.zeros((f_in, CF), jnp.bfloat16)
    wf = wf.at[:, :f_out].set(w2.astype(jnp.bfloat16))
    wf = wf.at[:, F_PAD:F_PAD + f_out].set(w1.astype(jnp.bfloat16))
    bf = jnp.zeros((1, CF), jnp.float32)
    bf = bf.at[0, :f_out].set(b2).at[0, F_PAD:F_PAD + f_out].set(b1)

    tm1 = _pick_tile(n_pad, MAX_TM, min_tiles=2 if n_pad >= 256 else 1)
    h0 = pl.pallas_call(
        encode_kernel,
        out_shape=jax.ShapeDtypeStruct((n_pad, CF), jnp.float32),
        grid_spec=pltpu.PrefetchScalarGridSpec(
            num_scalar_prefetch=0,
            grid=(n_pad // tm1,),
            in_specs=[pl.BlockSpec((tm1, f_in), lambda i: (i, 0)),
                      pl.BlockSpec((f_in, CF), lambda i: (0, 0)),
                      pl.BlockSpec((1, CF), lambda i: (0, 0))],
            out_specs=pl.BlockSpec((tm1, CF), lambda i: (i, 0)),
        ),
        compiler_params=pltpu.CompilerParams(
            dimension_semantics=("parallel",),
            vmem_limit_bytes=vmem_limit),
    )(xp, wf, bf)

    # A_hat: pad + cast directly into bf16 (no intermediate n_pad^2 f32 array).
    ap = jnp.zeros((n_pad, n_pad), PROP_MATMUL_DTYPE)
    ap = ap.at[:n, :n].set(a_hat.astype(PROP_MATMUL_DTYPE))
    # TODO(synk): fp8 (v7x) / int8 (v5e,v6e) A_hat with a folded dequant scale, and a
    # CSR/block-sparse SpMM via PrefetchScalarGridSpec for large sparse graphs.

    # ---- Stage 2: K fused APPNP passes (both mu/aux paths propagated together) ----
    resident_bytes = (n_pad * n_pad * 2          # A_hat (bf16)
                      + 4 * n_pad * CF * 4)      # h0, out, h + temporaries (f32)
    if resident_bytes <= vmem_limit:
        h = _propagate_resident(ap, h0, vmem_limit)
    else:
        tm = _pick_tile(n_pad, MAX_TM, min_tiles=2 if n_pad >= 256 else 1)
        tk = _pick_tile(n_pad, MAX_TK)
        h = _propagate_streamed(ap, h0, tm, tk, vmem_limit)

    mu = h[:n, :f_out]                       # linear2 path (normalized, propagated)
    x_aux = h[:n, F_PAD:F_PAD + f_out]       # linear1 path (propagated)
    return mu, x_aux


def build_normalized_adjacency(edge_index, num_nodes):
    """Dense GCN-normalized adjacency (approximates PyG gcn_norm).

    A_hat = D^{-1/2} (A + I_remaining) D^{-1/2}, A[dst, src] += 1 per edge; self
    loops added only for nodes that do not already have one (add_remaining_self_loops).
    """
    src, dst = edge_index[0], edge_index[1]
    a = jnp.zeros((num_nodes, num_nodes), jnp.float32)
    a = a.at[dst, src].add(1.0)
    diag = jnp.diagonal(a)
    a = a + jnp.diag(jnp.where(diag == 0, 1.0, 0.0))
    deg = jnp.sum(a, axis=1)
    d_inv_sqrt = jnp.where(deg > 0, 1.0 / jnp.sqrt(deg), 0.0)
    return a * d_inv_sqrt[:, None] * d_inv_sqrt[None, :]


def reference_forward(x, w1, b1, w2, b2, a_hat):
    """Pure-JAX f32 reference of the VGNAE forward (for a tolerance check)."""
    def prop(h0):
        h = h0
        for _ in range(K):
            h = (1.0 - ALPHA) * (a_hat @ h) + ALPHA * h0
        return h
    h1 = x @ w1 + b1
    h2 = x @ w2 + b2
    norm = jnp.sqrt(jnp.sum(h2 * h2, axis=1, keepdims=True))
    h2 = h2 / jnp.maximum(norm, EPS) * SCALING_FACTOR
    return prop(h2), prop(h1)


if __name__ == "__main__":
    # Small deterministic problem: N=16 nodes, in_channels=32, out_channels=16.
    N, F_IN, F_OUT = 16, 32, 16
    key = jax.random.PRNGKey(0)
    kx, k1, k2, k3, k4 = jax.random.split(key, 5)

    x = jax.random.normal(kx, (N, F_IN), jnp.float32)

    # torch.nn.Linear-style init: U(-1/sqrt(fan_in), 1/sqrt(fan_in)).
    bound = 1.0 / jnp.sqrt(jnp.float32(F_IN))
    w1 = jax.random.uniform(k1, (F_IN, F_OUT), jnp.float32, -bound, bound)
    b1 = jax.random.uniform(k2, (F_OUT,), jnp.float32, -bound, bound)
    w2 = jax.random.uniform(k3, (F_IN, F_OUT), jnp.float32, -bound, bound)
    b2 = jax.random.uniform(k4, (F_OUT,), jnp.float32, -bound, bound)

    # Deterministic ring graph (both directions), edge_index shape [2, 2N].
    nodes = jnp.arange(N, dtype=jnp.int32)
    nxt = (nodes + 1) % N
    edge_index = jnp.stack([jnp.concatenate([nodes, nxt]),
                            jnp.concatenate([nxt, nodes])], axis=0)

    a_hat = build_normalized_adjacency(edge_index, N)

    mu, x_aux = encoder_forward(x, w1, b1, w2, b2, a_hat)
    jax.block_until_ready((mu, x_aux))

    assert mu.shape == (N, F_OUT) and x_aux.shape == (N, F_OUT)
    assert jnp.all(jnp.isfinite(mu)) and jnp.all(jnp.isfinite(x_aux))

    # Loose tolerance: Stage-1 and propagation MXU operands are bf16 (f32 accum).
    mu_ref, aux_ref = reference_forward(x, w1, b1, w2, b2, a_hat)
    assert jnp.allclose(mu, mu_ref, atol=5e-2, rtol=5e-2)
    assert jnp.allclose(x_aux, aux_ref, atol=5e-2, rtol=5e-2)

    print("KERNEL_OK")
</pallas_src>

<mosaic_0001>
module attributes {stable_mosaic.version = 11 : i64} {
  func.func @encode_kernel(%arg0: i32, %arg1: memref<128x32xbf16, #tpu.memory_space<vmem>>, %arg2: memref<32x128xbf16, #tpu.memory_space<vmem>>, %arg3: memref<1x128xf32, #tpu.memory_space<vmem>>, %arg4: memref<128x128xf32, #tpu.memory_space<vmem>>) attributes {dimension_semantics = [#tpu.dimension_semantics<parallel>], iteration_bounds = array<i64: 1>, scalar_prefetch = 0 : i64, scratch_operands = 0 : i64, tpu.core_type = #tpu.core_type<tc>, window_params = [{transform_indices = @transform_0, window_bounds = array<i64: 128, 32>}, {pipeline_mode = #tpu.pipeline_mode<synchronous>, transform_indices = @transform_1, window_bounds = array<i64: 32, 128>}, {pipeline_mode = #tpu.pipeline_mode<synchronous>, transform_indices = @transform_2, window_bounds = array<i64: 1, 128>}, {transform_indices = @transform_3, window_bounds = array<i64: 128, 128>}]} {
    %c0 = arith.constant 0 : index
    %c0_0 = arith.constant 0 : index
    %0 = vector.load %arg1[%c0, %c0_0] : memref<128x32xbf16, #tpu.memory_space<vmem>>, vector<128x32xbf16>
    %c0_1 = arith.constant 0 : index
    %c0_2 = arith.constant 0 : index
    %1 = vector.load %arg2[%c0_1, %c0_2] : memref<32x128xbf16, #tpu.memory_space<vmem>>, vector<32x128xbf16>
    %cst = arith.constant dense<0.000000e+00> : vector<128x128xf32>
    %2 = tpu.matmul %0, %1, %cst {dimension_numbers = #tpu.dot_dimension_numbers<[1], [0], [0], [1], [0, 0, 1, 1], [], []>} : vector<128x32xbf16>, vector<32x128xbf16>, vector<128x128xf32> -> vector<128x128xf32>
    %c0_3 = arith.constant 0 : index
    %c0_4 = arith.constant 0 : index
    %3 = vector.load %arg3[%c0_3, %c0_4] : memref<1x128xf32, #tpu.memory_space<vmem>>, vector<1x128xf32>
    %4 = vector.broadcast %3 : vector<1x128xf32> to vector<128x128xf32>
    %5 = arith.addf %2, %4 : vector<128x128xf32>
    %6 = tpu.iota {dimensions = array<i32: 1>} : vector<128x128xi32>
    %c64_i32 = arith.constant 64 : i32
    %7 = vector.broadcast %c64_i32 : i32 to vector<128x128xi32>
    %8 = arith.cmpi slt, %6, %7 : vector<128x128xi32>
    %9 = arith.mulf %5, %5 : vector<128x128xf32>
    %cst_5 = arith.constant 0.000000e+00 : f32
    %10 = vector.broadcast %cst_5 : f32 to vector<128x128xf32>
    %11 = arith.select %8, %9, %10 : vector<128x128xi1>, vector<128x128xf32>
    %cst_6 = arith.constant dense<0.000000e+00> : vector<128xf32>
    %12 = vector.multi_reduction <add>, %11, %cst_6 [1] : vector<128x128xf32> to vector<128xf32>
    %13 = vector.shape_cast %12 : vector<128xf32> to vector<128x1xf32>
    %cst_7 = arith.constant 1.000000e-24 : f32
    %14 = vector.broadcast %cst_7 : f32 to vector<128x1xf32>
    %15 = arith.maximumf %13, %14 : vector<128x1xf32>
    %16 = math.rsqrt %15 : vector<128x1xf32>
    %cst_8 = arith.constant 1.800000e+00 : f32
    %17 = vector.broadcast %cst_8 : f32 to vector<128x1xf32>
    %18 = arith.mulf %17, %16 : vector<128x1xf32>
    %19 = vector.broadcast %18 : vector<128x1xf32> to vector<128x128xf32>
    %20 = arith.mulf %5, %19 : vector<128x128xf32>
    %21 = arith.select %8, %20, %5 : vector<128x128xi1>, vector<128x128xf32>
    %c0_9 = arith.constant 0 : index
    %c0_10 = arith.constant 0 : index
    %22 = vector.load %arg4[%c0_9, %c0_10] : memref<128x128xf32, #tpu.memory_space<vmem>>, vector<128x128xf32>
    tpu.vector_store %arg4[%c0_9, %c0_10], %21 {strides = array<i32>} : memref<128x128xf32, #tpu.memory_space<vmem>>, vector<128x128xf32>,
    return
  }
  func.func @transform_0(%arg0: i32) -> (i32, i32) {
    %c0_i32 = arith.constant 0 : i32
    %c0_i32_0 = arith.constant 0 : i32
    return %arg0, %c0_i32 : i32, i32
  }
  func.func @transform_1(%arg0: i32) -> (i32, i32) {
    %c0_i32 = arith.constant 0 : i32
    %c0_i32_0 = arith.constant 0 : i32
    %c0_i32_1 = arith.constant 0 : i32
    return %c0_i32, %c0_i32_0 : i32, i32
  }
  func.func @transform_2(%arg0: i32) -> (i32, i32) {
    %c0_i32 = arith.constant 0 : i32
    %c0_i32_0 = arith.constant 0 : i32
    %c0_i32_1 = arith.constant 0 : i32
    return %c0_i32, %c0_i32_0 : i32, i32
  }
  func.func @transform_3(%arg0: i32) -> (i32, i32) {
    %c0_i32 = arith.constant 0 : i32
    %c0_i32_0 = arith.constant 0 : i32
    return %arg0, %c0_i32 : i32, i32
  }
}

module attributes {stable_mosaic.version = 11 : i64} {
  func.func @appnp_resident_kernel(%arg0: i32, %arg1: memref<128x128xbf16, #tpu.memory_space<vmem>>, %arg2: memref<128x128xf32, #tpu.memory_space<vmem>>, %arg3: memref<128x128xf32, #tpu.memory_space<vmem>>) attributes {dimension_semantics = [#tpu.dimension_semantics<arbitrary>], iteration_bounds = array<i64: 1>, scalar_prefetch = 0 : i64, scratch_operands = 0 : i64, tpu.core_type = #tpu.core_type<tc>, window_params = [{pipeline_mode = #tpu.pipeline_mode<synchronous>, transform_indices = @transform_0, window_bounds = array<i64: 128, 128>}, {pipeline_mode = #tpu.pipeline_mode<synchronous>, transform_indices = @transform_1, window_bounds = array<i64: 128, 128>}, {pipeline_mode = #tpu.pipeline_mode<synchronous>, transform_indices = @transform_2, window_bounds = array<i64: 128, 128>}]} {
    %c0 = arith.constant 0 : index
    %c0_0 = arith.constant 0 : index
    %0 = vector.load %arg1[%c0, %c0_0] : memref<128x128xbf16, #tpu.memory_space<vmem>>, vector<128x128xbf16>
    %c0_1 = arith.constant 0 : index
    %c0_2 = arith.constant 0 : index
    %1 = vector.load %arg2[%c0_1, %c0_2] : memref<128x128xf32, #tpu.memory_space<vmem>>, vector<128x128xf32>
    %2 = arith.truncf %1 : vector<128x128xf32> to vector<128x128xbf16>
    %cst = arith.constant dense<0.000000e+00> : vector<128x128xf32>
    %3 = tpu.matmul %0, %2, %cst {dimension_numbers = #tpu.dot_dimension_numbers<[1], [0], [0], [1], [0, 0, 1, 1], [], []>} : vector<128x128xbf16>, vector<128x128xbf16>, vector<128x128xf32> -> vector<128x128xf32>
    %cst_3 = arith.constant 5.000000e-01 : f32
    %4 = vector.broadcast %cst_3 : f32 to vector<128x128xf32>
    %5 = arith.mulf %4, %3 : vector<128x128xf32>
    %cst_4 = arith.constant 5.000000e-01 : f32
    %6 = vector.broadcast %cst_4 : f32 to vector<128x128xf32>
    %7 = arith.mulf %6, %1 : vector<128x128xf32>
    %8 = arith.addf %5, %7 : vector<128x128xf32>
    %9 = arith.truncf %8 : vector<128x128xf32> to vector<128x128xbf16>
    %cst_5 = arith.constant dense<0.000000e+00> : vector<128x128xf32>
    %10 = tpu.matmul %0, %9, %cst_5 {dimension_numbers = #tpu.dot_dimension_numbers<[1], [0], [0], [1], [0, 0, 1, 1], [], []>} : vector<128x128xbf16>, vector<128x128xbf16>, vector<128x128xf32> -> vector<128x128xf32>
    %cst_6 = arith.constant 5.000000e-01 : f32
    %11 = vector.broadcast %cst_6 : f32 to vector<128x128xf32>
    %12 = arith.mulf %11, %10 : vector<128x128xf32>
    %cst_7 = arith.constant 5.000000e-01 : f32
    %13 = vector.broadcast %cst_7 : f32 to vector<128x128xf32>
    %14 = arith.mulf %13, %1 : vector<128x128xf32>
    %15 = arith.addf %12, %14 : vector<128x128xf32>
    %c0_8 = arith.constant 0 : index
    %c0_9 = arith.constant 0 : index
    %16 = vector.load %arg3[%c0_8, %c0_9] : memref<128x128xf32, #tpu.memory_space<vmem>>, vector<128x128xf32>
    tpu.vector_store %arg3[%c0_8, %c0_9], %15 {strides = array<i32>} : memref<128x128xf32, #tpu.memory_space<vmem>>, vector<128x128xf32>,
    return
  }
  func.func @transform_0(%arg0: i32) -> (i32, i32) {
    %c0_i32 = arith.constant 0 : i32
    %c0_i32_0 = arith.constant 0 : i32
    %c0_i32_1 = arith.constant 0 : i32
    return %c0_i32, %c0_i32_0 : i32, i32
  }
  func.func @transform_1(%arg0: i32) -> (i32, i32) {
    %c0_i32 = arith.constant 0 : i32
    %c0_i32_0 = arith.constant 0 : i32
    %c0_i32_1 = arith.constant 0 : i32
    return %c0_i32, %c0_i32_0 : i32, i32
  }
  func.func @transform_2(%arg0: i32) -> (i32, i32) {
    %c0_i32 = arith.constant 0 : i32
    %c0_i32_0 = arith.constant 0 : i32
    %c0_i32_1 = arith.constant 0 : i32
    return %c0_i32, %c0_i32_0 : i32, i32
  }
}

</mosaic_0001>

<llo_original>
// kernel: encoder_forward.3
$region0: #{encoder_forward.3}
  #allocation0 [shape = 'u32[]', space=smem, size = 0x4, offset = 0x4, fixed_abs, tag = 'smem constant byte address 0x4 - core index']
  #allocation1 [shape = 'u32[144,128]{1,0:T(1,128)}', space=vmem, size = 0x12000, scoped, tag = 'internal scratch']
  %s0 = inlined_call_operand.vmem [shape: bf16[128,128], index: 0, kind: input, shape index: {}]
  %s1 = inlined_call_operand.vmem [shape: f32[128,128], index: 1, kind: input, shape index: {}]
  %s2 = inlined_call_operand.vmem [shape: f32[128,128], index: 2, kind: output, shape index: {}]
  %s3 = sld [smem:[#allocation0]]
  $region18: #{encoder_forward.3} parent=0
    _
  %s5 = ssub.s32 1, %s3
  %s6 = scalar_select 0, %s5, %s3
  // Predicated region
  $region2: #{encoder_forward.3} parent=0 // pred_check
    _
  $region3: #{encoder_forward.3} parent=0 // pred_check_branch
    %8 = sbr.rel (0) target = $region5
  $region4: #{encoder_forward.3} parent=0 // pred_region
    _
  $region5: #{encoder_forward.3} parent=0 // pred_fallthru
    _
  // Predicated region
  $region6: #{encoder_forward.3} parent=0 // pred_check
    _
  $region7: #{encoder_forward.3} parent=0 // pred_check_branch
    %10 = sbr.rel (0) target = $region9
  $region8: #{encoder_forward.3} parent=0 // pred_region
    _
  $region9: #{encoder_forward.3} parent=0 // pred_fallthru
    _
  %v12 = vld [vmem:[%s0] sm:$0xf]
  %v13 = vld [vmem:[%s0 + $0x4] sm:$0xf]
  %v14 = vld [vmem:[%s0 + $0x8] sm:$0xf]
  %v15 = vld [vmem:[%s0 + $0xc] sm:$0xf]
  %v16 = vld [vmem:[%s0 + $0x10] sm:$0xf]
  %v17 = vld [vmem:[%s0 + $0x14] sm:$0xf]
  %v18 = vld [vmem:[%s0 + $0x18] sm:$0xf]
  %v19 = vld [vmem:[%s0 + $0x1c] sm:$0xf]
  %v20 = vld [vmem:[%s0 + $0x20] sm:$0xf]
  %v21 = vld [vmem:[%s0 + $0x24] sm:$0xf]
  %v22 = vld [vmem:[%s0 + $0x28] sm:$0xf]
  %v23 = vld [vmem:[%s0 + $0x2c] sm:$0xf]
  %v24 = vld [vmem:[%s0 + $0x30] sm:$0xf]
  %v25 = vld [vmem:[%s0 + $0x34] sm:$0xf]
  %v26 = vld [vmem:[%s0 + $0x38] sm:$0xf]
  %v27 = vld [vmem:[%s0 + $0x3c] sm:$0xf]
  %v28 = vld [vmem:[%s1] sm:$0xff]
  %v29 = vld [vmem:[%s1 + $0x8] sm:$0xff]
  %v30 = vld [vmem:[%s1 + $0x10] sm:$0xff]
  %v31 = vld [vmem:[%s1 + $0x18] sm:$0xff]
  %v32 = vld [vmem:[%s1 + $0x20] sm:$0xff]
  %v33 = vld [vmem:[%s1 + $0x28] sm:$0xff]
  %v34 = vld [vmem:[%s1 + $0x30] sm:$0xff]
  %v35 = vld [vmem:[%s1 + $0x38] sm:$0xff]
  %v36 = vld [vmem:[%s1 + $0x40] sm:$0xff]
  %v37 = vld [vmem:[%s1 + $0x48] sm:$0xff]
  %v38 = vld [vmem:[%s1 + $0x50] sm:$0xff]
  %v39 = vld [vmem:[%s1 + $0x58] sm:$0xff]
  %v40 = vld [vmem:[%s1 + $0x60] sm:$0xff]
  %v41 = vld [vmem:[%s1 + $0x68] sm:$0xff]
  %v42 = vld [vmem:[%s1 + $0x70] sm:$0xff]
  %v43 = vld [vmem:[%s1 + $0x78] sm:$0xff]
  %v44 = vpack.c.bf16 %v29, %v28
  %v45 = vpack.c.bf16 %v31, %v30
  %v46 = vpack.c.bf16 %v33, %v32
  %v47 = vpack.c.bf16 %v35, %v34
  %v48 = vpack.c.bf16 %v37, %v36
  %v49 = vpack.c.bf16 %v39, %v38
  %v50 = vpack.c.bf16 %v41, %v40
  %v51 = vpack.c.bf16 %v43, %v42
  %v68 = vunpack.c.l.b16 %v12
  %v69 = vunpack.c.l.b16 %v13
  %v70 = vunpack.c.l.b16 %v14
  %v71 = vunpack.c.l.b16 %v15
  %v72 = vunpack.c.l.b16 %v16
  %v73 = vunpack.c.l.b16 %v17
  %v74 = vunpack.c.l.b16 %v18
  %v75 = vunpack.c.l.b16 %v19
  %v76 = vunpack.c.l.b16 %v20
  %v77 = vunpack.c.l.b16 %v21
  %v78 = vunpack.c.l.b16 %v22
  %v79 = vunpack.c.l.b16 %v23
  %v80 = vunpack.c.l.b16 %v24
  %v81 = vunpack.c.l.b16 %v25
  %v82 = vunpack.c.l.b16 %v26
  %v83 = vunpack.c.l.b16 %v27
  %v84 = vpack.c.b16 %v69, %v68
  %v85 = vpack.c.b16 %v71, %v70
  %v86 = vpack.c.b16 %v73, %v72
  %v87 = vpack.c.b16 %v75, %v74
  %v88 = vpack.c.b16 %v77, %v76
  %v89 = vpack.c.b16 %v79, %v78
  %v90 = vpack.c.b16 %v81, %v80
  %v91 = vpack.c.b16 %v83, %v82
  %100 = vmatprep.subr.bf16.mxu0 0
  %101 = vmatpush1.bf16.msra.mxu0 %v44
  %102 = vmatprep.subr.bf16.mxu0 0
  %103 = vmatpush1.bf16.msra.mxu0 %v45
  %104 = vmatprep.subr.bf16.mxu0 0
  %105 = vmatpush1.bf16.msra.mxu0 %v46
  %106 = vmatprep.subr.bf16.mxu0 0
  %107 = vmatpush1.bf16.msra.mxu0 %v47
  %108 = vmatprep.subr.bf16.mxu0 0
  %109 = vmatpush1.bf16.msra.mxu0 %v48
  %110 = vmatprep.subr.bf16.mxu0 0
  %111 = vmatpush1.bf16.msra.mxu0 %v49
  %112 = vmatprep.subr.bf16.mxu0 0
  %113 = vmatpush1.bf16.msra.mxu0 %v50
  %114 = vmatprep.subr.bf16.mxu0 0
  %115 = vmatpush1.bf16.msra.mxu0 %v51
  %116 = vmatprep.subr.bf16.mxu0 0
  %117 = vmatpush1.bf16.msra.mxu0 0
  %118 = vmatprep.subr.bf16.mxu0 0
  %119 = vmatpush1.bf16.msra.mxu0 0
  %120 = vmatprep.subr.bf16.mxu0 0
  %121 = vmatpush1.bf16.msra.mxu0 0
  %122 = vmatprep.subr.bf16.mxu0 0
  %123 = vmatpush1.bf16.msra.mxu0 0
  %124 = vmatprep.subr.bf16.mxu0 0
  %125 = vmatpush1.bf16.msra.mxu0 0
  %126 = vmatprep.subr.bf16.mxu0 0
  %127 = vmatpush1.bf16.msra.mxu0 0
  %128 = vmatprep.subr.bf16.mxu0 0
  %129 = vmatpush1.bf16.msra.mxu0 0
  %130 = vmatprep.subr.bf16.mxu0 0
  %131 = vmatpush1.bf16.msra.mxu0 0
  %132 = vmatprep.mubr.bf16.mxu0 0
  %133 = vmatmul.mubr.bf16.gmra.mrb[0].mxu0 %v84
  %v134 = vpop.f32.mrb[0].mxu0
  %v135 = vadd.f32 0.0, %v134
  %v136 = vpop.f32.mrb[0].mxu0
  %v137 = vpop.f32.mrb[0].mxu0
  %v138 = vadd.f32 0.0, %v137
  %v139 = vpop.f32.mrb[0].mxu0
  %140 = vmatprep.mubr.bf16.mxu0 0
  %141 = vmatmul.mubr.bf16.gmra.mrb[0].mxu0 %v85
  %v142 = vpop.f32.mrb[0].mxu0
  %v143 = vadd.f32 0.0, %v142
  %v144 = vpop.f32.mrb[0].mxu0
  %v145 = vpop.f32.mrb[0].mxu0
  %v146 = vadd.f32 0.0, %v145
  %v147 = vpop.f32.mrb[0].mxu0
  %148 = vmatprep.mubr.bf16.mxu0 0
  %149 = vmatmul.mubr.bf16.gmra.mrb[0].mxu0 %v86
  %v150 = vpop.f32.mrb[0].mxu0
  %v151 = vadd.f32 0.0, %v150
  %v152 = vpop.f32.mrb[0].mxu0
  %v153 = vpop.f32.mrb[0].mxu0
  %v154 = vadd.f32 0.0, %v153
  %v155 = vpop.f32.mrb[0].mxu0
  %156 = vmatprep.mubr.bf16.mxu0 0
  %157 = vmatmul.mubr.bf16.gmra.mrb[0].mxu0 %v87
  %v158 = vpop.f32.mrb[0].mxu0
  %v159 = vadd.f32 0.0, %v158
  %v160 = vpop.f32.mrb[0].mxu0
  %v161 = vpop.f32.mrb[0].mxu0
  %v162 = vadd.f32 0.0, %v161
  %v163 = vpop.f32.mrb[0].mxu0
  %164 = vmatprep.mubr.bf16.mxu0 0
  %165 = vmatmul.mubr.bf16.gmra.mrb[0].mxu0 %v88
  %v166 = vpop.f32.mrb[0].mxu0
  %v167 = vadd.f32 0.0, %v166
  %v168 = vpop.f32.mrb[0].mxu0
  %v169 = vpop.f32.mrb[0].mxu0
  %v170 = vadd.f32 0.0, %v169
  %v171 = vpop.f32.mrb[0].mxu0
  %172 = vmatprep.mubr.bf16.mxu0 0
  %173 = vmatmul.mubr.bf16.gmra.mrb[0].mxu0 %v89
  %v174 = vpop.f32.mrb[0].mxu0
  %v175 = vadd.f32 0.0, %v174
  %v176 = vpop.f32.mrb[0].mxu0
  %v177 = vpop.f32.mrb[0].mxu0
  %v178 = vadd.f32 0.0, %v177
  %v179 = vpop.f32.mrb[0].mxu0
  %180 = vmatprep.mubr.bf16.mxu0 0
  %181 = vmatmul.mubr.bf16.gmra.mrb[0].mxu0 %v90
  %v182 = vpop.f32.mrb[0].mxu0
  %v183 = vadd.f32 0.0, %v182
  %v184 = vpop.f32.mrb[0].mxu0
  %v185 = vpop.f32.mrb[0].mxu0
  %v186 = vadd.f32 0.0, %v185
  %v187 = vpop.f32.mrb[0].mxu0
  %188 = vmatprep.mubr.bf16.mxu0 0
  %189 = vmatmul.mubr.bf16.gmra.mrb[0].mxu0 %v91
  %v190 = vpop.f32.mrb[0].mxu0
  %v191 = vadd.f32 0.0, %v190
  %v192 = vpop.f32.mrb[0].mxu0
  %v193 = vpop.f32.mrb[0].mxu0
  %v194 = vadd.f32 0.0, %v193
  %v195 = vpop.f32.mrb[0].mxu0
  %196 = vdwg.mxu0
  %v197 = vmul.f32 %v135, 0.5
  %v198 = vmul.f32 %v138, 0.5
  %v199 = vmul.f32 %v143, 0.5
  %v200 = vmul.f32 %v146, 0.5
  %v201 = vmul.f32 %v151, 0.5
  %v202 = vmul.f32 %v154, 0.5
  %v203 = vmul.f32 %v159, 0.5
  %v204 = vmul.f32 %v162, 0.5
  %v205 = vmul.f32 %v167, 0.5
  %v206 = vmul.f32 %v170, 0.5
  %v207 = vmul.f32 %v175, 0.5
  %v208 = vmul.f32 %v178, 0.5
  %v209 = vmul.f32 %v183, 0.5
  %v210 = vmul.f32 %v186, 0.5
  %v211 = vmul.f32 %v191, 0.5
  %v212 = vmul.f32 %v194, 0.5
  %v213 = vmul.f32 %v28, 0.5
  %v214 = vmul.f32 %v29, 0.5
  %v215 = vmul.f32 %v30, 0.5
  %v216 = vmul.f32 %v31, 0.5
  %v217 = vmul.f32 %v32, 0.5
  %v218 = vmul.f32 %v33, 0.5
  %v219 = vmul.f32 %v34, 0.5
  %v220 = vmul.f32 %v35, 0.5
  %v221 = vmul.f32 %v36, 0.5
  %v222 = vmul.f32 %v37, 0.5
  %v223 = vmul.f32 %v38, 0.5
  %v224 = vmul.f32 %v39, 0.5
  %v225 = vmul.f32 %v40, 0.5
  %v226 = vmul.f32 %v41, 0.5
  %v227 = vmul.f32 %v42, 0.5
  %v228 = vmul.f32 %v43, 0.5
  %v229 = vadd.f32 %v197, %v213
  %v230 = vadd.f32 %v198, %v214
  %v231 = vadd.f32 %v199, %v215
  %v232 = vadd.f32 %v200, %v216
  %v233 = vadd.f32 %v201, %v217
  %v234 = vadd.f32 %v202, %v218
  %v235 = vadd.f32 %v203, %v219
  %v236 = vadd.f32 %v204, %v220
  %v237 = vadd.f32 %v205, %v221
  %v238 = vadd.f32 %v206, %v222
  %v239 = vadd.f32 %v207, %v223
  %v240 = vadd.f32 %v208, %v224
  %v241 = vadd.f32 %v209, %v225
  %v242 = vadd.f32 %v210, %v226
  %v243 = vadd.f32 %v211, %v227
  %v244 = vadd.f32 %v212, %v228
  %v245 = vpack.c.bf16 %v230, %v229
  %v246 = vpack.c.bf16 %v232, %v231
  %v247 = vpack.c.bf16 %v234, %v233
  %v248 = vpack.c.bf16 %v236, %v235
  %v249 = vpack.c.bf16 %v238, %v237
  %v250 = vpack.c.bf16 %v240, %v239
  %v251 = vpack.c.bf16 %v242, %v241
  %v252 = vpack.c.bf16 %v244, %v243
  %253 = vmatprep.subr.bf16.mxu0 0
  %254 = vmatpush1.bf16.msra.mxu0 %v245
  %255 = vmatprep.subr.bf16.mxu0 0
  %256 = vmatpush1.bf16.msra.mxu0 %v246
  %257 = vmatprep.subr.bf16.mxu0 0
  %258 = vmatpush1.bf16.msra.mxu0 %v247
  %259 = vmatprep.subr.bf16.mxu0 0
  %260 = vmatpush1.bf16.msra.mxu0 %v248
  %261 = vmatprep.subr.bf16.mxu0 0
  %262 = vmatpush1.bf16.msra.mxu0 %v249
  %263 = vmatprep.subr.bf16.mxu0 0
  %264 = vmatpush1.bf16.msra.mxu0 %v250
  %265 = vmatprep.subr.bf16.mxu0 0
  %266 = vmatpush1.bf16.msra.mxu0 %v251
  %267 = vmatprep.subr.bf16.mxu0 0
  %268 = vmatpush1.bf16.msra.mxu0 %v252
  %269 = vmatprep.subr.bf16.mxu0 0
  %270 = vmatpush1.bf16.msra.mxu0 0
  %271 = vmatprep.subr.bf16.mxu0 0
  %272 = vmatpush1.bf16.msra.mxu0 0
  %273 = vmatprep.subr.bf16.mxu0 0
  %274 = vmatpush1.bf16.msra.mxu0 0
  %275 = vmatprep.subr.bf16.mxu0 0
  %276 = vmatpush1.bf16.msra.mxu0 0
  %277 = vmatprep.subr.bf16.mxu0 0
  %278 = vmatpush1.bf16.msra.mxu0 0
  %279 = vmatprep.subr.bf16.mxu0 0
  %280 = vmatpush1.bf16.msra.mxu0 0
  %281 = vmatprep.subr.bf16.mxu0 0
  %282 = vmatpush1.bf16.msra.mxu0 0
  %283 = vmatprep.subr.bf16.mxu0 0
  %284 = vmatpush1.bf16.msra.mxu0 0
  %285 = vmatprep.mubr.bf16.mxu0 0
  %286 = vmatmul.mubr.bf16.gmra.mrb[0].mxu0 %v84
  %v287 = vpop.f32.mrb[0].mxu0
  %v288 = vadd.f32 0.0, %v287
  %v289 = vpop.f32.mrb[0].mxu0
  %v290 = vpop.f32.mrb[0].mxu0
  %v291 = vadd.f32 0.0, %v290
  %v292 = vpop.f32.mrb[0].mxu0
  %293 = vmatprep.mubr.bf16.mxu0 0
  %294 = vmatmul.mubr.bf16.gmra.mrb[0].mxu0 %v85
  %v295 = vpop.f32.mrb[0].mxu0
  %v296 = vadd.f32 0.0, %v295
  %v297 = vpop.f32.mrb[0].mxu0
  %v298 = vpop.f32.mrb[0].mxu0
  %v299 = vadd.f32 0.0, %v298
  %v300 = vpop.f32.mrb[0].mxu0
  %301 = vmatprep.mubr.bf16.mxu0 0
  %302 = vmatmul.mubr.bf16.gmra.mrb[0].mxu0 %v86
  %v303 = vpop.f32.mrb[0].mxu0
  %v304 = vadd.f32 0.0, %v303
  %v305 = vpop.f32.mrb[0].mxu0
  %v306 = vpop.f32.mrb[0].mxu0
  %v307 = vadd.f32 0.0, %v306
  %v308 = vpop.f32.mrb[0].mxu0
  %309 = vmatprep.mubr.bf16.mxu0 0
  %310 = vmatmul.mubr.bf16.gmra.mrb[0].mxu0 %v87
  %v311 = vpop.f32.mrb[0].mxu0
  %v312 = vadd.f32 0.0, %v311
  %v313 = vpop.f32.mrb[0].mxu0
  %v314 = vpop.f32.mrb[0].mxu0
  %v315 = vadd.f32 0.0, %v314
  %v316 = vpop.f32.mrb[0].mxu0
  %317 = vmatprep.mubr.bf16.mxu0 0
  %318 = vmatmul.mubr.bf16.gmra.mrb[0].mxu0 %v88
  %v319 = vpop.f32.mrb[0].mxu0
  %v320 = vadd.f32 0.0, %v319
  %v321 = vpop.f32.mrb[0].mxu0
  %v322 = vpop.f32.mrb[0].mxu0
  %v323 = vadd.f32 0.0, %v322
  %v324 = vpop.f32.mrb[0].mxu0
  %325 = vmatprep.mubr.bf16.mxu0 0
  %326 = vmatmul.mubr.bf16.gmra.mrb[0].mxu0 %v89
  %v327 = vpop.f32.mrb[0].mxu0
  %v328 = vadd.f32 0.0, %v327
  %v329 = vpop.f32.mrb[0].mxu0
  %v330 = vpop.f32.mrb[0].mxu0
  %v331 = vadd.f32 0.0, %v330
  %v332 = vpop.f32.mrb[0].mxu0
  %333 = vmatprep.mubr.bf16.mxu0 0
  %334 = vmatmul.mubr.bf16.gmra.mrb[0].mxu0 %v90
  %v335 = vpop.f32.mrb[0].mxu0
  %v336 = vadd.f32 0.0, %v335
  %v337 = vpop.f32.mrb[0].mxu0
  %v338 = vpop.f32.mrb[0].mxu0
  %v339 = vadd.f32 0.0, %v338
  %v340 = vpop.f32.mrb[0].mxu0
  %341 = vmatprep.mubr.bf16.mxu0 0
  %342 = vmatmul.mubr.bf16.gmra.mrb[0].mxu0 %v91
  %v343 = vpop.f32.mrb[0].mxu0
  %v344 = vadd.f32 0.0, %v343
  %v345 = vpop.f32.mrb[0].mxu0
  %v346 = vpop.f32.mrb[0].mxu0
  %v347 = vadd.f32 0.0, %v346
  %v348 = vpop.f32.mrb[0].mxu0
  %349 = vdwg.mxu0
  %v350 = vmul.f32 %v288, 0.5
  %v351 = vmul.f32 %v291, 0.5
  %v352 = vmul.f32 %v296, 0.5
  %v353 = vmul.f32 %v299, 0.5
  %v354 = vmul.f32 %v304, 0.5
  %v355 = vmul.f32 %v307, 0.5
  %v356 = vmul.f32 %v312, 0.5
  %v357 = vmul.f32 %v315, 0.5
  %v358 = vmul.f32 %v320, 0.5
  %v359 = vmul.f32 %v323, 0.5
  %v360 = vmul.f32 %v328, 0.5
  %v361 = vmul.f32 %v331, 0.5
  %v362 = vmul.f32 %v336, 0.5
  %v363 = vmul.f32 %v339, 0.5
  %v364 = vmul.f32 %v344, 0.5
  %v365 = vmul.f32 %v347, 0.5
  %v366 = vadd.f32 %v350, %v213
  %v367 = vadd.f32 %v351, %v214
  %v368 = vadd.f32 %v352, %v215
  %v369 = vadd.f32 %v353, %v216
  %v370 = vadd.f32 %v354, %v217
  %v371 = vadd.f32 %v355, %v218
  %v372 = vadd.f32 %v356, %v219
  %v373 = vadd.f32 %v357, %v220
  %v374 = vadd.f32 %v358, %v221
  %v375 = vadd.f32 %v359, %v222
  %v376 = vadd.f32 %v360, %v223
  %v377 = vadd.f32 %v361, %v224
  %v378 = vadd.f32 %v362, %v225
  %v379 = vadd.f32 %v363, %v226
  %v380 = vadd.f32 %v364, %v227
  %v381 = vadd.f32 %v365, %v228
  %382 = vst [vmem:[%s2] sm:$0xff] %v366
  %383 = vst [vmem:[%s2 + $0x8] sm:$0xff] %v367
  %384 = vst [vmem:[%s2 + $0x10] sm:$0xff] %v368
  %385 = vst [vmem:[%s2 + $0x18] sm:$0xff] %v369
  %386 = vst [vmem:[%s2 + $0x20] sm:$0xff] %v370
  %387 = vst [vmem:[%s2 + $0x28] sm:$0xff] %v371
  %388 = vst [vmem:[%s2 + $0x30] sm:$0xff] %v372
  %389 = vst [vmem:[%s2 + $0x38] sm:$0xff] %v373
  %390 = vst [vmem:[%s2 + $0x40] sm:$0xff] %v374
  %391 = vst [vmem:[%s2 + $0x48] sm:$0xff] %v375
  %392 = vst [vmem:[%s2 + $0x50] sm:$0xff] %v376
  %393 = vst [vmem:[%s2 + $0x58] sm:$0xff] %v377
  %394 = vst [vmem:[%s2 + $0x60] sm:$0xff] %v378
  %395 = vst [vmem:[%s2 + $0x68] sm:$0xff] %v379
  %396 = vst [vmem:[%s2 + $0x70] sm:$0xff] %v380
  %397 = vst [vmem:[%s2 + $0x78] sm:$0xff] %v381
  // Predicated region
  $region10: #{encoder_forward.3} parent=0 // pred_check
    _
  $region11: #{encoder_forward.3} parent=0 // pred_check_branch
    %399 = sbr.rel (0) target = $region13
  $region12: #{encoder_forward.3} parent=0 // pred_region
    _
  $region13: #{encoder_forward.3} parent=0 // pred_fallthru
    _
  // Predicated region
  $region14: #{encoder_forward.3} parent=0 // pred_check
    _
  $region15: #{encoder_forward.3} parent=0 // pred_check_branch
    %401 = sbr.rel (0) target = $region17
  $region16: #{encoder_forward.3} parent=0 // pred_region
    _
  $region17: #{encoder_forward.3} parent=0 // pred_fallthru
    _

// kernel: encoder_forward.2
$region0: #{encoder_forward.2}
  #allocation0 [shape = 'u32[]', space=smem, size = 0x4, offset = 0x4, fixed_abs, tag = 'smem constant byte address 0x4 - core index']
  #allocation1 [shape = 'u32[144,128]{1,0:T(1,128)}', space=vmem, size = 0x12000, scoped, tag = 'internal scratch']
  %s0 = inlined_call_operand.vmem [shape: bf16[128,32], index: 0, kind: input, shape index: {}]
  %s1 = inlined_call_operand.vmem [shape: bf16[32,128], index: 1, kind: input, shape index: {}]
  %s2 = inlined_call_operand.vmem [shape: f32[1,128], index: 2, kind: input, shape index: {}]
  %s3 = inlined_call_operand.vmem [shape: f32[128,128], index: 3, kind: output, shape index: {}]
  %s4 = sld [smem:[#allocation0]]
  $region22: #{encoder_forward.2} parent=0
    _
  %s6 = ssub.s32 1, %s4
  %s7 = scalar_select 0, %s6, %s4
  // Predicated region
  $region2: #{encoder_forward.2} parent=0 // pred_check
    _
  $region3: #{encoder_forward.2} parent=0 // pred_check_branch
    %9 = sbr.rel (0) target = $region5
  $region4: #{encoder_forward.2} parent=0 // pred_region
    _
  $region5: #{encoder_forward.2} parent=0 // pred_fallthru
    _
  // Predicated region
  $region6: #{encoder_forward.2} parent=0 // pred_check
    _
  $region7: #{encoder_forward.2} parent=0 // pred_check_branch
    %11 = sbr.rel (0) target = $region9
  $region8: #{encoder_forward.2} parent=0 // pred_region
    _
  $region9: #{encoder_forward.2} parent=0 // pred_fallthru
    _
  // Predicated region
  $region10: #{encoder_forward.2} parent=0 // pred_check
    _
  $region11: #{encoder_forward.2} parent=0 // pred_check_branch
    %13 = sbr.rel (0) target = $region13
  $region12: #{encoder_forward.2} parent=0 // pred_region
    _
  $region13: #{encoder_forward.2} parent=0 // pred_fallthru
    _
  %v15 = vld [vmem:[%s0] sm:$0xf]
  %v16 = vld [vmem:[%s0 + $0x4] sm:$0xf]
  %v17 = vld [vmem:[%s0 + $0x8] sm:$0xf]
  %v18 = vld [vmem:[%s0 + $0xc] sm:$0xf]
  %v19 = vld [vmem:[%s0 + $0x10] sm:$0xf]
  %v20 = vld [vmem:[%s0 + $0x14] sm:$0xf]
  %v21 = vld [vmem:[%s0 + $0x18] sm:$0xf]
  %v22 = vld [vmem:[%s0 + $0x1c] sm:$0xf]
  %v23 = vld [vmem:[%s0 + $0x20] sm:$0xf]
  %v24 = vld [vmem:[%s0 + $0x24] sm:$0xf]
  %v25 = vld [vmem:[%s0 + $0x28] sm:$0xf]
  %v26 = vld [vmem:[%s0 + $0x2c] sm:$0xf]
  %v27 = vld [vmem:[%s0 + $0x30] sm:$0xf]
  %v28 = vld [vmem:[%s0 + $0x34] sm:$0xf]
  %v29 = vld [vmem:[%s0 + $0x38] sm:$0xf]
  %v30 = vld [vmem:[%s0 + $0x3c] sm:$0xf]
  %v31 = vld [vmem:[%s1] sm:$0xf]
  %v32 = vld [vmem:[%s1 + $0x4] sm:$0xf]
  %v33 = vld [vmem:[%s1 + $0x8] sm:$0xf]
  %v34 = vld [vmem:[%s1 + $0xc] sm:$0xf]
  %v35 = vld [vmem:[%s2] sm:$0x1]
  %v37 = vlaneseq
  %v38 = vshrl.u32 %v37, 7
  %v39 = vsub.s32 0, %v38
  %v40 = vrot.slane %v35, %v39
  %v58 = vunpack.c.l.b16 %v15
  %v59 = vunpack.c.l.b16 %v16
  %v60 = vunpack.c.l.b16 %v17
  %v61 = vunpack.c.l.b16 %v18
  %v62 = vunpack.c.l.b16 %v19
  %v63 = vunpack.c.l.b16 %v20
  %v64 = vunpack.c.l.b16 %v21
  %v65 = vunpack.c.l.b16 %v22
  %v66 = vunpack.c.l.b16 %v23
  %v67 = vunpack.c.l.b16 %v24
  %v68 = vunpack.c.l.b16 %v25
  %v69 = vunpack.c.l.b16 %v26
  %v70 = vunpack.c.l.b16 %v27
  %v71 = vunpack.c.l.b16 %v28
  %v72 = vunpack.c.l.b16 %v29
  %v73 = vunpack.c.l.b16 %v30
  %v74 = vpack.c.b16 %v59, %v58
  %v75 = vpack.c.b16 %v61, %v60
  %v76 = vpack.c.b16 %v63, %v62
  %v77 = vpack.c.b16 %v65, %v64
  %v78 = vpack.c.b16 %v67, %v66
  %v79 = vpack.c.b16 %v69, %v68
  %v80 = vpack.c.b16 %v71, %v70
  %v81 = vpack.c.b16 %v73, %v72
  %v86 = vunpack.c.l.b16 %v31
  %v87 = vunpack.c.l.b16 %v32
  %v88 = vunpack.c.l.b16 %v33
  %v89 = vunpack.c.l.b16 %v34
  %v90 = vpack.c.b16 %v87, %v86
  %v91 = vpack.c.b16 %v89, %v88
  %vm94 = vcmask 261120
  %v96 = vsel %vm94, %v74, 0
  %v99 = vsel %vm94, %v75, 0
  %v102 = vsel %vm94, %v76, 0
  %v105 = vsel %vm94, %v77, 0
  %v108 = vsel %vm94, %v78, 0
  %v111 = vsel %vm94, %v79, 0
  %v114 = vsel %vm94, %v80, 0
  %v117 = vsel %vm94, %v81, 0
  %119 = vmatprep.subr.bf16.mxu0 0
  %120 = vmatpush1.bf16.msra.mxu0 %v90
  %121 = vmatprep.subr.bf16.mxu0 0
  %122 = vmatpush1.bf16.msra.mxu0 %v91
  %123 = vmatprep.subr.bf16.mxu0 0
  %124 = vmatpush1.bf16.msra.mxu0 0
  %125 = vmatprep.subr.bf16.mxu0 0
  %126 = vmatpush1.bf16.msra.mxu0 0
  %127 = vmatprep.subr.bf16.mxu0 0
  %128 = vmatpush1.bf16.msra.mxu0 0
  %129 = vmatprep.subr.bf16.mxu0 0
  %130 = vmatpush1.bf16.msra.mxu0 0
  %131 = vmatprep.subr.bf16.mxu0 0
  %132 = vmatpush1.bf16.msra.mxu0 0
  %133 = vmatprep.subr.bf16.mxu0 0
  %134 = vmatpush1.bf16.msra.mxu0 0
  %135 = vmatprep.subr.bf16.mxu0 0
  %136 = vmatpush1.bf16.msra.mxu0 0
  %137 = vmatprep.subr.bf16.mxu0 0
  %138 = vmatpush1.bf16.msra.mxu0 0
  %139 = vmatprep.subr.bf16.mxu0 0
  %140 = vmatpush1.bf16.msra.mxu0 0
  %141 = vmatprep.subr.bf16.mxu0 0
  %142 = vmatpush1.bf16.msra.mxu0 0
  %143 = vmatprep.subr.bf16.mxu0 0
  %144 = vmatpush1.bf16.msra.mxu0 0
  %145 = vmatprep.subr.bf16.mxu0 0
  %146 = vmatpush1.bf16.msra.mxu0 0
  %147 = vmatprep.subr.bf16.mxu0 0
  %148 = vmatpush1.bf16.msra.mxu0 0
  %149 = vmatprep.subr.bf16.mxu0 0
  %150 = vmatpush1.bf16.msra.mxu0 0
  %151 = vmatprep.mubr.bf16.mxu0 0
  %152 = vmatmul.mubr.bf16.gmra.mrb[0].mxu0 %v96
  %v153 = vpop.f32.mrb[0].mxu0
  %v154 = vadd.f32 %v40, %v153
  %v155 = vpop.f32.mrb[0].mxu0
  %v156 = vpop.f32.mrb[0].mxu0
  %v157 = vadd.f32 %v40, %v156
  %v158 = vpop.f32.mrb[0].mxu0
  %159 = vmatprep.mubr.bf16.mxu0 0
  %160 = vmatmul.mubr.bf16.gmra.mrb[0].mxu0 %v99
  %v161 = vpop.f32.mrb[0].mxu0
  %v162 = vadd.f32 %v40, %v161
  %v163 = vpop.f32.mrb[0].mxu0
  %v164 = vpop.f32.mrb[0].mxu0
  %v165 = vadd.f32 %v40, %v164
  %v166 = vpop.f32.mrb[0].mxu0
  %167 = vmatprep.mubr.bf16.mxu0 0
  %168 = vmatmul.mubr.bf16.gmra.mrb[0].mxu0 %v102
  %v169 = vpop.f32.mrb[0].mxu0
  %v170 = vadd.f32 %v40, %v169
  %v171 = vpop.f32.mrb[0].mxu0
  %v172 = vpop.f32.mrb[0].mxu0
  %v173 = vadd.f32 %v40, %v172
  %v174 = vpop.f32.mrb[0].mxu0
  %175 = vmatprep.mubr.bf16.mxu0 0
  %176 = vmatmul.mubr.bf16.gmra.mrb[0].mxu0 %v105
  %v177 = vpop.f32.mrb[0].mxu0
  %v178 = vadd.f32 %v40, %v177
  %v179 = vpop.f32.mrb[0].mxu0
  %v180 = vpop.f32.mrb[0].mxu0
  %v181 = vadd.f32 %v40, %v180
  %v182 = vpop.f32.mrb[0].mxu0
  %183 = vmatprep.mubr.bf16.mxu0 0
  %184 = vmatmul.mubr.bf16.gmra.mrb[0].mxu0 %v108
  %v185 = vpop.f32.mrb[0].mxu0
  %v186 = vadd.f32 %v40, %v185
  %v187 = vpop.f32.mrb[0].mxu0
  %v188 = vpop.f32.mrb[0].mxu0
  %v189 = vadd.f32 %v40, %v188
  %v190 = vpop.f32.mrb[0].mxu0
  %191 = vmatprep.mubr.bf16.mxu0 0
  %192 = vmatmul.mubr.bf16.gmra.mrb[0].mxu0 %v111
  %v193 = vpop.f32.mrb[0].mxu0
  %v194 = vadd.f32 %v40, %v193
  %v195 = vpop.f32.mrb[0].mxu0
  %v196 = vpop.f32.mrb[0].mxu0
  %v197 = vadd.f32 %v40, %v196
  %v198 = vpop.f32.mrb[0].mxu0
  %199 = vmatprep.mubr.bf16.mxu0 0
  %200 = vmatmul.mubr.bf16.gmra.mrb[0].mxu0 %v114
  %v201 = vpop.f32.mrb[0].mxu0
  %v202 = vadd.f32 %v40, %v201
  %v203 = vpop.f32.mrb[0].mxu0
  %v204 = vpop.f32.mrb[0].mxu0
  %v205 = vadd.f32 %v40, %v204
  %v206 = vpop.f32.mrb[0].mxu0
  %207 = vmatprep.mubr.bf16.mxu0 0
  %208 = vmatmul.mubr.bf16.gmra.mrb[0].mxu0 %v117
  %v209 = vpop.f32.mrb[0].mxu0
  %v210 = vadd.f32 %v40, %v209
  %v211 = vpop.f32.mrb[0].mxu0
  %v212 = vpop.f32.mrb[0].mxu0
  %v213 = vadd.f32 %v40, %v212
  %v214 = vpop.f32.mrb[0].mxu0
  %215 = vdwg.mxu0
  %v216 = vlaneseq
  %v217 = vand.u32 %v216, 127
  %vm218 = vcmp.lt.s32.totalorder %v217, 64
  %v219 = vmul.f32 %v154, %v154
  %v220 = vmul.f32 %v157, %v157
  %v221 = vmul.f32 %v162, %v162
  %v222 = vmul.f32 %v165, %v165
  %v223 = vmul.f32 %v170, %v170
  %v224 = vmul.f32 %v173, %v173
  %v225 = vmul.f32 %v178, %v178
  %v226 = vmul.f32 %v181, %v181
  %v227 = vmul.f32 %v186, %v186
  %v228 = vmul.f32 %v189, %v189
  %v229 = vmul.f32 %v194, %v194
  %v230 = vmul.f32 %v197, %v197
  %v231 = vmul.f32 %v202, %v202
  %v232 = vmul.f32 %v205, %v205
  %v233 = vmul.f32 %v210, %v210
  %v234 = vmul.f32 %v213, %v213
  %v235 = vsel %vm218, %v219, 0.0
  %v236 = vsel %vm218, %v220, 0.0
  %v237 = vsel %vm218, %v221, 0.0
  %v238 = vsel %vm218, %v222, 0.0
  %v239 = vsel %vm218, %v223, 0.0
  %v240 = vsel %vm218, %v224, 0.0
  %v241 = vsel %vm218, %v225, 0.0
  %v242 = vsel %vm218, %v226, 0.0
  %v243 = vsel %vm218, %v227, 0.0
  %v244 = vsel %vm218, %v228, 0.0
  %v245 = vsel %vm218, %v229, 0.0
  %v246 = vsel %vm218, %v230, 0.0
  %v247 = vsel %vm218, %v231, 0.0
  %v248 = vsel %vm218, %v232, 0.0
  %v249 = vsel %vm218, %v233, 0.0
  %v250 = vsel %vm218, %v234, 0.0
  %251 = vadd.xlane.f32.xlu0 %v235
  %v252 = vpop.xlane.xlu0 %251
  %253 = vadd.xlane.f32.xlu0 %v236
  %v254 = vpop.xlane.xlu0 %253
  %255 = vadd.xlane.f32.xlu0 %v237
  %v256 = vpop.xlane.xlu0 %255
  %257 = vadd.xlane.f32.xlu0 %v238
  %v258 = vpop.xlane.xlu0 %257
  %259 = vadd.xlane.f32.xlu0 %v239
  %v260 = vpop.xlane.xlu0 %259
  %261 = vadd.xlane.f32.xlu0 %v240
  %v262 = vpop.xlane.xlu0 %261
  %263 = vadd.xlane.f32.xlu0 %v241
  %v264 = vpop.xlane.xlu0 %263
  %265 = vadd.xlane.f32.xlu0 %v242
  %v266 = vpop.xlane.xlu0 %265
  %267 = vadd.xlane.f32.xlu0 %v243
  %v268 = vpop.xlane.xlu0 %267
  %269 = vadd.xlane.f32.xlu0 %v244
  %v270 = vpop.xlane.xlu0 %269
  %271 = vadd.xlane.f32.xlu0 %v245
  %v272 = vpop.xlane.xlu0 %271
  %273 = vadd.xlane.f32.xlu0 %v246
  %v274 = vpop.xlane.xlu0 %273
  %275 = vadd.xlane.f32.xlu0 %v247
  %v276 = vpop.xlane.xlu0 %275
  %277 = vadd.xlane.f32.xlu0 %v248
  %v278 = vpop.xlane.xlu0 %277
  %279 = vadd.xlane.f32.xlu0 %v249
  %v280 = vpop.xlane.xlu0 %279
  %281 = vadd.xlane.f32.xlu0 %v250
  %v282 = vpop.xlane.xlu0 %281
  %v283 = vmax.f32 %v252, 1e-24
  %v284 = vmax.f32 %v254, 1e-24
  %v285 = vmax.f32 %v256, 1e-24
  %v286 = vmax.f32 %v258, 1e-24
  %v287 = vmax.f32 %v260, 1e-24
  %v288 = vmax.f32 %v262, 1e-24
  %v289 = vmax.f32 %v264, 1e-24
  %v290 = vmax.f32 %v266, 1e-24
  %v291 = vmax.f32 %v268, 1e-24
  %v292 = vmax.f32 %v270, 1e-24
  %v293 = vmax.f32 %v272, 1e-24
  %v294 = vmax.f32 %v274, 1e-24
  %v295 = vmax.f32 %v276, 1e-24
  %v296 = vmax.f32 %v278, 1e-24
  %v297 = vmax.f32 %v280, 1e-24
  %v298 = vmax.f32 %v282, 1e-24
  %v299 = vrsqrt.pop %v283
  %v300 = vrsqrt.pop %v284
  %v301 = vrsqrt.pop %v285
  %v302 = vrsqrt.pop %v286
  %v303 = vrsqrt.pop %v287
  %v304 = vrsqrt.pop %v288
  %v305 = vrsqrt.pop %v289
  %v306 = vrsqrt.pop %v290
  %v307 = vrsqrt.pop %v291
  %v308 = vrsqrt.pop %v292
  %v309 = vrsqrt.pop %v293
  %v310 = vrsqrt.pop %v294
  %v311 = vrsqrt.pop %v295
  %v312 = vrsqrt.pop %v296
  %v313 = vrsqrt.pop %v297
  %v314 = vrsqrt.pop %v298
  %v315 = vmul.f32 %v299, 1.8
  %v316 = vmul.f32 %v300, 1.8
  %v317 = vmul.f32 %v301, 1.8
  %v318 = vmul.f32 %v302, 1.8
  %v319 = vmul.f32 %v303, 1.8
  %v320 = vmul.f32 %v304, 1.8
  %v321 = vmul.f32 %v305, 1.8
  %v322 = vmul.f32 %v306, 1.8
  %v323 = vmul.f32 %v307, 1.8
  %v324 = vmul.f32 %v308, 1.8
  %v325 = vmul.f32 %v309, 1.8
  %v326 = vmul.f32 %v310, 1.8
  %v327 = vmul.f32 %v311, 1.8
  %v328 = vmul.f32 %v312, 1.8
  %v329 = vmul.f32 %v313, 1.8
  %v330 = vmul.f32 %v314, 1.8
  %v331 = vmul.f32 %v154, %v315
  %v332 = vmul.f32 %v157, %v316
  %v333 = vmul.f32 %v162, %v317
  %v334 = vmul.f32 %v165, %v318
  %v335 = vmul.f32 %v170, %v319
  %v336 = vmul.f32 %v173, %v320
  %v337 = vmul.f32 %v178, %v321
  %v338 = vmul.f32 %v181, %v322
  %v339 = vmul.f32 %v186, %v323
  %v340 = vmul.f32 %v189, %v324
  %v341 = vmul.f32 %v194, %v325
  %v342 = vmul.f32 %v197, %v326
  %v343 = vmul.f32 %v202, %v327
  %v344 = vmul.f32 %v205, %v328
  %v345 = vmul.f32 %v210, %v329
  %v346 = vmul.f32 %v213, %v330
  %v347 = vsel %vm218, %v331, %v154
  %v348 = vsel %vm218, %v332, %v157
  %v349 = vsel %vm218, %v333, %v162
  %v350 = vsel %vm218, %v334, %v165
  %v351 = vsel %vm218, %v335, %v170
  %v352 = vsel %vm218, %v336, %v173
  %v353 = vsel %vm218, %v337, %v178
  %v354 = vsel %vm218, %v338, %v181
  %v355 = vsel %vm218, %v339, %v186
  %v356 = vsel %vm218, %v340, %v189
  %v357 = vsel %vm218, %v341, %v194
  %v358 = vsel %vm218, %v342, %v197
  %v359 = vsel %vm218, %v343, %v202
  %v360 = vsel %vm218, %v344, %v205
  %v361 = vsel %vm218, %v345, %v210
  %v362 = vsel %vm218, %v346, %v213
  %363 = vst [vmem:[%s3] sm:$0xff] %v347
  %364 = vst [vmem:[%s3 + $0x8] sm:$0xff] %v348
  %365 = vst [vmem:[%s3 + $0x10] sm:$0xff] %v349
  %366 = vst [vmem:[%s3 + $0x18] sm:$0xff] %v350
  %367 = vst [vmem:[%s3 + $0x20] sm:$0xff] %v351
  %368 = vst [vmem:[%s3 + $0x28] sm:$0xff] %v352
  %369 = vst [vmem:[%s3 + $0x30] sm:$0xff] %v353
  %370 = vst [vmem:[%s3 + $0x38] sm:$0xff] %v354
  %371 = vst [vmem:[%s3 + $0x40] sm:$0xff] %v355
  %372 = vst [vmem:[%s3 + $0x48] sm:$0xff] %v356
  %373 = vst [vmem:[%s3 + $0x50] sm:$0xff] %v357
  %374 = vst [vmem:[%s3 + $0x58] sm:$0xff] %v358
  %375 = vst [vmem:[%s3 + $0x60] sm:$0xff] %v359
  %376 = vst [vmem:[%s3 + $0x68] sm:$0xff] %v360
  %377 = vst [vmem:[%s3 + $0x70] sm:$0xff] %v361
  %378 = vst [vmem:[%s3 + $0x78] sm:$0xff] %v362
  // Predicated region
  $region14: #{encoder_forward.2} parent=0 // pred_check
    _
  $region15: #{encoder_forward.2} parent=0 // pred_check_branch
    %380 = sbr.rel (0) target = $region17
  $region16: #{encoder_forward.2} parent=0 // pred_region
    _
  $region17: #{encoder_forward.2} parent=0 // pred_fallthru
    _
  // Predicated region
  $region18: #{encoder_forward.2} parent=0 // pred_check
    _
  $region19: #{encoder_forward.2} parent=0 // pred_check_branch
    %382 = sbr.rel (0) target = $region21
  $region20: #{encoder_forward.2} parent=0 // pred_region
    _
  $region21: #{encoder_forward.2} parent=0 // pred_fallthru
    _

</llo_original>
